<compile_context>
chip_gen: v5e
topology: v5e:2x2
jax: 0.10.0
libtpu: 0.0.40
codegen_flags: <defaults>
</compile_context>

<pallas_src>
import math

import jax
import jax.numpy as jnp
from jax.experimental import pallas as pl
from jax.experimental.pallas import tpu as pltpu


_TARGET_BLOCK_BYTES = 4 * 1024 * 1024   # ~4 MiB blocks; double-buffered in+out ~ 16 MiB
_VMEM_LIMIT_BYTES = 48 * 1024 * 1024    # < 64 MiB physical on v7x, > all default scoped limits


def _drop_path_kernel(scale_ref, x_ref, o_ref):
    """o = x * scale[batch].  scale_ref: (TB, 1) in x.dtype; x_ref/o_ref: (TP, TB, TN)."""
    scale = scale_ref[...]                      # (TB, 1), already x.dtype
    o_ref[...] = x_ref[...] * scale[None, :, :]  # broadcast over pre (TP) and lanes (TN)


def _choose_tiles(pre, B, post, itemsize):
    """Pick (tp, tb, tn) block dims: lane-dense, VMEM-bounded, no over-padding."""
    target_elems = max(1, _TARGET_BLOCK_BYTES // itemsize)

    # Lane tile along `post`: multiple of 128 (ragged last block is fine) or full dim.
    if post <= 128:
        tn = post
    else:
        tn = min(pl.cdiv(post, 128) * 128,
                 max(128, (target_elems // max(B, 1)) // 128 * 128))
        if tn >= post:
            tn = post                            # full dim -> always a legal block shape

    # Sublane tile along batch: full B if it fits, else a multiple of 8.
    if B * tn > target_elems and B > 8:
        tb = max(8, (target_elems // max(tn, 1)) // 8 * 8)
        tb = min(tb, B)
    else:
        tb = B

    # Leading tile along `pre` (no divisibility constraint): grow to fill the budget.
    tp = 1
    blk = tb * tn
    if pre > 1 and blk < target_elems:
        tp = min(pre, max(1, target_elems // blk))

    # v7x megacore: make sure the grid has at least 2 blocks when splittable,
    # otherwise one TensorCore idles and we get half the per-chip HBM roofline.
    grid_total = pl.cdiv(pre, tp) * pl.cdiv(B, tb) * pl.cdiv(post, tn)
    if grid_total == 1 and post > 128:
        tn = pl.cdiv(pl.cdiv(post, 2), 128) * 128

    return tp, tb, tn


def drop_path_pallas(x, drop_prob=0.0, training=False, batch_dim=0, *,
                     seed=0, key=None, donate_x=False):
    """Pallas equivalent of the pix2seq drop_path() forward pass."""
    if drop_prob == 0.0 or not training:
        return x
    keep_prob = 1.0 - float(drop_prob)

    if key is None:
        key = jax.random.PRNGKey(seed)

    orig_shape = x.shape
    bd = batch_dim % x.ndim
    B = orig_shape[bd]
    pre = math.prod(orig_shape[:bd]) if bd > 0 else 1
    post = math.prod(orig_shape[bd + 1:]) if bd < x.ndim - 1 else 1

    # Pure metadata reshape (row-major contiguous): no data movement, no transpose.
    x3 = x.reshape(pre, B, post)

    # Per-sample Bernoulli(keep_prob) scale, hoisted out of the kernel and
    # pre-cast to x.dtype:  scale[b] = floor(keep_prob + U[0,1)) / keep_prob.
    u = jax.random.uniform(key, (B, 1), dtype=jnp.float32)
    scale = (jnp.floor(keep_prob + u) * (1.0 / keep_prob)).astype(x.dtype)

    itemsize = x.dtype.itemsize
    tp, tb, tn = _choose_tiles(pre, B, post, itemsize)
    grid = (pl.cdiv(pre, tp), pl.cdiv(B, tb), pl.cdiv(post, tn))

    total = pre * B * post
    cost = pl.CostEstimate(flops=total, transcendentals=0,
                           bytes_accessed=2 * total * itemsize + B * itemsize)

    out = pl.pallas_call(
        _drop_path_kernel,
        out_shape=jax.ShapeDtypeStruct((pre, B, post), x.dtype),
        grid=grid,
        in_specs=[
            pl.BlockSpec((tb, 1), lambda p, b, n: (b, 0)),        # per-sample scale
            pl.BlockSpec((tp, tb, tn), lambda p, b, n: (p, b, n)),  # x tile
        ],
        out_specs=pl.BlockSpec((tp, tb, tn), lambda p, b, n: (p, b, n)),
        compiler_params=pltpu.CompilerParams(
            dimension_semantics=("parallel", "parallel", "parallel"),
            vmem_limit_bytes=_VMEM_LIMIT_BYTES,
        ),
        cost_estimate=cost,
        input_output_aliases=({1: 0} if donate_x else {}),
    )(scale, x3)

    return out.reshape(orig_shape)


class DropPath:
    """Minimal JAX stand-in for the nn.Module wrapper."""

    def __init__(self, drop_prob=None, batch_dim=0):
        self.drop_prob = 0.0 if drop_prob is None else drop_prob
        self.batch_dim = batch_dim
        self.training = True

    def __call__(self, x, seed=0, key=None):
        return drop_path_pallas(
            x, self.drop_prob, self.training, self.batch_dim, seed=seed, key=key
        )


if __name__ == "__main__":
    import numpy as np

    key = jax.random.PRNGKey(0)
    x = jax.random.normal(key, (2, 4, 16, 16), dtype=jnp.float32)

    drop_prob = 0.3
    keep_prob = 1.0 - drop_prob
    seed = 1234

    # Training mode with nonzero drop probability: stochastic depth is active.
    module = DropPath(drop_prob=drop_prob, batch_dim=0)
    module.training = True
    y = jax.block_until_ready(module(x, seed=seed))
    y_np = np.asarray(y)
    x_np = np.asarray(x)

    # Exact reference using the same RNG stream as the wrapper.
    B = x.shape[0]
    u = jax.random.uniform(jax.random.PRNGKey(seed), (B, 1), dtype=jnp.float32)
    ref_scale = np.asarray(jnp.floor(keep_prob + u) * (1.0 / keep_prob)).reshape(B, 1, 1, 1)
    expected = x_np * ref_scale
    np.testing.assert_allclose(y_np, expected, rtol=1e-6, atol=1e-6)

    # Sanity check: each sample is either zeroed or scaled by 1/keep_prob.
    for b in range(B):
        kept = np.allclose(y_np[b], x_np[b] / keep_prob, rtol=1e-5, atol=1e-5)
        dropped = np.allclose(y_np[b], 0.0)
        assert kept or dropped, f"sample {b}: not a valid drop-path output"

    # batch_dim != 0 path: no transpose, 3-D grid, scale indexed by batch coord.
    x2 = jax.random.normal(jax.random.PRNGKey(7), (2, 3, 16, 16), dtype=jnp.float32)
    mod2 = DropPath(drop_prob=0.5, batch_dim=1)
    mod2.training = True
    y2 = jax.block_until_ready(mod2(x2, seed=99))
    B2 = x2.shape[1]
    u2 = jax.random.uniform(jax.random.PRNGKey(99), (B2, 1), dtype=jnp.float32)
    s2 = np.asarray(jnp.floor(0.5 + u2) * 2.0).reshape(1, B2, 1, 1)
    np.testing.assert_allclose(np.asarray(y2), np.asarray(x2) * s2, rtol=1e-6, atol=1e-6)

    # Eval mode (or drop_prob == 0): identity.
    module.training = False
    y_eval = jax.block_until_ready(module(x))
    assert np.allclose(np.asarray(y_eval), x_np)

    print("KERNEL_OK")
</pallas_src>

<mosaic_0001>
module attributes {stable_mosaic.version = 11 : i64} {
  func.func @_drop_path_kernel(%arg0: i32, %arg1: i32, %arg2: i32, %arg3: memref<2x1xf32, #tpu.memory_space<vmem>>, %arg4: memref<1x2x512xf32, #tpu.memory_space<vmem>>, %arg5: memref<1x2x512xf32, #tpu.memory_space<vmem>>) attributes {dimension_semantics = [#tpu.dimension_semantics<parallel>, #tpu.dimension_semantics<parallel>, #tpu.dimension_semantics<parallel>], iteration_bounds = array<i64: 1, 1, 2>, scalar_prefetch = 0 : i64, scratch_operands = 0 : i64, tpu.core_type = #tpu.core_type<tc>, window_params = [{transform_indices = @transform_0, window_bounds = array<i64: 2, 1>}, {transform_indices = @transform_1, window_bounds = array<i64: 1, 2, 512>}, {transform_indices = @transform_2, window_bounds = array<i64: 1, 2, 512>}]} {
    %c0 = arith.constant 0 : index
    %c0_0 = arith.constant 0 : index
    %0 = vector.load %arg3[%c0, %c0_0] : memref<2x1xf32, #tpu.memory_space<vmem>>, vector<2x1xf32>
    %c0_1 = arith.constant 0 : index
    %c0_2 = arith.constant 0 : index
    %c0_3 = arith.constant 0 : index
    %1 = vector.load %arg4[%c0_1, %c0_2, %c0_3] : memref<1x2x512xf32, #tpu.memory_space<vmem>>, vector<1x2x512xf32>
    %2 = vector.shape_cast %0 : vector<2x1xf32> to vector<1x2x1xf32>
    %3 = vector.broadcast %2 : vector<1x2x1xf32> to vector<1x2x512xf32>
    %4 = arith.mulf %1, %3 : vector<1x2x512xf32>
    %c0_4 = arith.constant 0 : index
    %c0_5 = arith.constant 0 : index
    %c0_6 = arith.constant 0 : index
    %5 = vector.load %arg5[%c0_4, %c0_5, %c0_6] : memref<1x2x512xf32, #tpu.memory_space<vmem>>, vector<1x2x512xf32>
    tpu.vector_store %arg5[%c0_4, %c0_5, %c0_6], %4 {strides = array<i32>} : memref<1x2x512xf32, #tpu.memory_space<vmem>>, vector<1x2x512xf32>,
    return
  }
  func.func @transform_0(%arg0: i32, %arg1: i32, %arg2: i32) -> (i32, i32) {
    %c0_i32 = arith.constant 0 : i32
    %c0_i32_0 = arith.constant 0 : i32
    return %arg1, %c0_i32 : i32, i32
  }
  func.func @transform_1(%arg0: i32, %arg1: i32, %arg2: i32) -> (i32, i32, i32) {
    %c0_i32 = arith.constant 0 : i32
    return %arg0, %arg1, %arg2 : i32, i32, i32
  }
  func.func @transform_2(%arg0: i32, %arg1: i32, %arg2: i32) -> (i32, i32, i32) {
    %c0_i32 = arith.constant 0 : i32
    return %arg0, %arg1, %arg2 : i32, i32, i32
  }
}

</mosaic_0001>

<llo_original>
// kernel: tpu_custom_call.1
$region0: #{tpu_custom_call.1}
  #allocation0 [shape = 'u32[]', space=smem, size = 0x4, offset = 0x4, fixed_abs, tag = 'smem constant byte address 0x4 - core index']
  #allocation1 [shape = 'u32[72,128]{1,0:T(1,128)}', space=vmem, size = 0x9000, scoped, tag = 'internal scratch']
  %s0 = inlined_call_operand.vmem [shape: f32[2,1], index: 0, kind: input, shape index: {}]
  %s1 = inlined_call_operand.hbm [shape: f32[1,2,1024], index: 1, kind: input, shape index: {}]
  %s2 = inlined_call_operand.hbm [shape: f32[1,2,1024], index: 2, kind: output, shape index: {}]
  %s3 = sld [smem:[#allocation0]]
  $region45: #{tpu_custom_call.1} parent=0
    _
  %s5 = ssub.s32 1, %s3
  %s6 = scalar_select 0, %s5, %s3
  $region1: #{tpu_custom_call.1} parent=0
    #allocation2 [shape = 'u8[8192]{0}', space=vmem, size = 0x2000, scoped, tag = 'input window, operand 1']
    #allocation3 [shape = 's32[2]{0}', space=sflag, size = 0x8, scoped, tag = 'scoped memory for tpu_custom_call.1']
    #allocation4 [shape = 's32[2]{0}', space=sflag, size = 0x8, scoped, tag = 'scoped memory for tpu_custom_call.1']
    #allocation5 [shape = 'u8[8192]{0}', space=vmem, size = 0x2000, scoped, tag = 'output window, operand 0']
    %7 = vsyncpa [#allocation3], 0
    %s8 = scalar_lea.sflag [#allocation3], 1
    %9 = vsyncpa %s8, 0
    %10 = vsyncpa [#allocation4], 0
    %s11 = scalar_lea.sflag [#allocation4], 1
    %12 = vsyncpa %s11, 0
    loop: start=0, step=1, limit=4
    $region2: #{tpu_custom_call.1} parent=1 // loop_pre_header
      _
    $region3: #{tpu_custom_call.1} parent=1 // loop_header
      %s14 = sphi 0, %s18
      %p15 = scmp.ge.s32.totalorder %s14, 4
      %s21 = sphi 0, %s40
      %s22 = sphi 0, %s36
      %s23 = sphi 0, %s32
      %s24 = sphi 0, %s21
      %s25 = sphi 0, %s22
      %s26 = sphi 0, %s23
      %s27 = sphi 0, %s24
      %s28 = sphi 0, %s25
      %s29 = sphi 0, %s26
      %s43 = sphi 0, %s45
      %s46 = sphi 0, %s43
      %s47 = sphi 0, %s46
      %s63 = sphi 0, %s47
      %s73 = sphi 0, %s75
      %s76 = sphi 0, %s73
      %s77 = sphi 0, %s76
      %s93 = sphi 0, %s77
      %s103 = sphi 0, %s105
      %s106 = sphi 0, %s103
      %s107 = sphi 0, %s106
      %s123 = sphi 0, %s107
    $region4: #{tpu_custom_call.1} parent=1 // loop_header_branch
      %17 = sbr.rel (%p15) target = $region8
    $region5: #{tpu_custom_call.1} parent=1 // loop_body
      %s19 = ssub.s32 %s14, 1
      %s20 = ssub.s32 %s14, 2
      %s30 = sadd.s32 1, %s23
      %p31 = scmp.ge.s32.totalorder %s30, 2
      %s32 = scalar_select %p31, 0, %s30
      %s33 = sadd.s32 1, %s22
      %s34 = scalar_select %p31, %s33, %s22
      %p35 = scmp.ge.s32.totalorder %s34, 1
      %s36 = scalar_select %p35, 0, %s34
      %s37 = sadd.s32 1, %s21
      %s38 = scalar_select %p35, %s37, %s21
      %p39 = scmp.ge.s32.totalorder %s38, 1
      %s40 = scalar_select %p39, 0, %s38
      %s41 = ssub.s32 %s22, %s36
      %p42 = scmp.eq.s32.totalorder %s41, 0
      %s44 = sadd.s32 %s43, 1
      %s45 = scalar_select %p42, %s43, %s44
      %p48 = pneg %p42
      %p49 = scmp.eq.s32.totalorder %s14, 1
      %p50 = por %p48, %p49
      %p51 = scmp.ne.s32.totalorder %s43, %s46
      %p52 = scmp.eq.s32.totalorder %s14, 0
      %p53 = por %p51, %p52
      %p54 = scmp.ne.s32.totalorder %s43, %s46
      %p55 = scmp.eq.s32.totalorder %s19, 1
      %p56 = por %p54, %p55
      %p57 = scmp.ne.s32.totalorder %s46, %s47
      %p58 = scmp.eq.s32.totalorder %s19, 0
      %p59 = por %p57, %p58
      %p60 = scmp.ne.s32.totalorder %s46, %s47
      %p61 = scmp.eq.s32.totalorder %s20, 1
      %p62 = por %p60, %p61
      %p64 = scmp.ne.s32.totalorder %s47, %s63
      %p65 = scmp.eq.s32.totalorder %s20, 0
      %p66 = por %p64, %p65
      %s67 = ssub.s32 %s21, %s40
      %s68 = ssub.s32 %s22, %s36
      %s69 = sor.u32 %s67, %s68
      %s70 = ssub.s32 %s23, %s32
      %s71 = sor.u32 %s69, %s70
      %p72 = scmp.eq.s32.totalorder %s71, 0
      %s74 = sadd.s32 %s73, 1
      %s75 = scalar_select %p72, %s73, %s74
      %p78 = pneg %p72
      %p79 = scmp.eq.s32.totalorder %s14, 1
      %p80 = por %p78, %p79
      %p81 = scmp.ne.s32.totalorder %s73, %s76
      %p82 = scmp.eq.s32.totalorder %s14, 0
      %p83 = por %p81, %p82
      %p84 = scmp.ne.s32.totalorder %s73, %s76
      %p85 = scmp.eq.s32.totalorder %s19, 1
      %p86 = por %p84, %p85
      %p87 = scmp.ne.s32.totalorder %s76, %s77
      %p88 = scmp.eq.s32.totalorder %s19, 0
      %p89 = por %p87, %p88
      %p90 = scmp.ne.s32.totalorder %s76, %s77
      %p91 = scmp.eq.s32.totalorder %s20, 1
      %p92 = por %p90, %p91
      %p94 = scmp.ne.s32.totalorder %s77, %s93
      %p95 = scmp.eq.s32.totalorder %s20, 0
      %p96 = por %p94, %p95
      %s97 = ssub.s32 %s21, %s40
      %s98 = ssub.s32 %s22, %s36
      %s99 = sor.u32 %s97, %s98
      %s100 = ssub.s32 %s23, %s32
      %s101 = sor.u32 %s99, %s100
      %p102 = scmp.eq.s32.totalorder %s101, 0
      %s104 = sadd.s32 %s103, 1
      %s105 = scalar_select %p102, %s103, %s104
      %p108 = pneg %p102
      %p109 = scmp.eq.s32.totalorder %s14, 1
      %p110 = por %p108, %p109
      %p111 = scmp.ne.s32.totalorder %s103, %s106
      %p112 = scmp.eq.s32.totalorder %s14, 0
      %p113 = por %p111, %p112
      %p114 = scmp.ne.s32.totalorder %s103, %s106
      %p115 = scmp.eq.s32.totalorder %s19, 1
      %p116 = por %p114, %p115
      %p117 = scmp.ne.s32.totalorder %s106, %s107
      %p118 = scmp.eq.s32.totalorder %s19, 0
      %p119 = por %p117, %p118
      %p120 = scmp.ne.s32.totalorder %s106, %s107
      %p121 = scmp.eq.s32.totalorder %s20, 1
      %p122 = por %p120, %p121
      %p124 = scmp.ne.s32.totalorder %s107, %s123
      %p125 = scmp.eq.s32.totalorder %s20, 0
      %p126 = por %p124, %p125
      %p127 = scmp.le.s32.totalorder 1, %s14
      %p128 = scmp.lt.s32.totalorder %s14, 3
      %p129 = pnand %p127, %p128
      %p130 = pneg %p129
      // Predicated region
      $region9: #{tpu_custom_call.1} parent=5 // pred_check
        _
      $region10: #{tpu_custom_call.1} parent=5 // pred_check_branch
        %132 = sbr.rel (%p129) target = $region12
      $region11: #{tpu_custom_call.1} parent=5 // pred_region
        %s133 = ssub.s32 %s14, 1
        // Predicated region
        $region13: #{tpu_custom_call.1} parent=11 // pred_check
          %p134 = pneg %p59
        $region14: #{tpu_custom_call.1} parent=11 // pred_check_branch
          %136 = sbr.rel (%p134) target = $region16
        $region15: #{tpu_custom_call.1} parent=11 // pred_region
          %p137 = scmp.lt.s32.totalorder %s25, 0
          %s138 = scalar_select %p137, %s25, 0
          %s139 = smul.addr %s138, 2
          %s140 = scalar_lea.vmem %s0, %s139
        $region16: #{tpu_custom_call.1} parent=11 // pred_fallthru
          _
      $region12: #{tpu_custom_call.1} parent=5 // pred_fallthru
        _
      %p141 = scmp.lt.s32.totalorder %s14, 2
      // Predicated region
      $region17: #{tpu_custom_call.1} parent=5 // pred_check
        %p142 = pneg %p141
      $region18: #{tpu_custom_call.1} parent=5 // pred_check_branch
        %144 = sbr.rel (%p142) target = $region20
      $region19: #{tpu_custom_call.1} parent=5 // pred_region
        // Predicated region
        $region21: #{tpu_custom_call.1} parent=19 // pred_check
          %p145 = pneg %p83
        $region22: #{tpu_custom_call.1} parent=19 // pred_check_branch
          %147 = sbr.rel (%p145) target = $region24
        $region23: #{tpu_custom_call.1} parent=19 // pred_region
          %s148 = sand.u32 %s73, 1
          %s149 = scalar_lea.sflag [#allocation3], %s148
          %s150 = sand.u32 %s73, 1
          %s151 = smul.addr %s150, 8
          %s152 = scalar_lea.vmem [#allocation2], %s151
          %s153 = smul.u32 4, %s23
          %155 = vsyncadd %s149, 0
          %s156 = smul.addr %s22, 8
          %s157 = sadd.s32 %s153, %s156
          %s158 = smul.addr %s21, 8
          %s159 = sadd.s32 %s157, %s158
          %s160 = smul.addr %s159, 2
          %s161 = scalar_lea.hbm %s1, %s160
          %s163 = sshll.u32 %s161, 4
          %s164 = int_to_ptr.hbm [resolvable:$true] %s163
          %s165 = sshll.u32 %s152, 4
          %s166 = int_to_ptr.vmem [resolvable:$true] %s165
          %168 = dma.hbm_to_vmem [thread:$0]  %s164, 128, %s166, %s149
        $region24: #{tpu_custom_call.1} parent=19 // pred_fallthru
          _
      $region20: #{tpu_custom_call.1} parent=5 // pred_fallthru
        _
      %p169 = scmp.le.s32.totalorder 1, %s14
      %p170 = scmp.lt.s32.totalorder %s14, 3
      %p171 = pnand %p169, %p170
      %p172 = pneg %p171
      // Predicated region
      $region25: #{tpu_custom_call.1} parent=5 // pred_check
        _
      $region26: #{tpu_custom_call.1} parent=5 // pred_check_branch
        %174 = sbr.rel (%p171) target = $region28
      $region27: #{tpu_custom_call.1} parent=5 // pred_region
        %s175 = ssub.s32 %s14, 1
        %s176 = sand.u32 %s76, 1
        %s177 = scalar_lea.sflag [#allocation3], %s176
        %s178 = sand.u32 %s76, 1
        %s179 = smul.addr %s178, 8
        %s180 = scalar_lea.vmem [#allocation2], %s179
        // Predicated region
        $region29: #{tpu_custom_call.1} parent=27 // pred_check
          %p181 = pneg %p89
        $region30: #{tpu_custom_call.1} parent=27 // pred_check_branch
          %183 = sbr.rel (%p181) target = $region32
        $region31: #{tpu_custom_call.1} parent=27 // pred_region
          %185 = dma.done %s177, 128
        $region32: #{tpu_custom_call.1} parent=27 // pred_fallthru
          _
        %p186 = scmp.lt.s32.totalorder %s25, 0
        %s187 = scalar_select %p186, %s25, 0
        %s188 = smul.addr %s187, 2
        %s189 = scalar_lea.vmem %s0, %s188
        %p190 = pneg %p59
        %p191 = pneg %p56
        %s192 = sand.u32 %s76, 1
        %s193 = scalar_lea.sflag [#allocation3], %s192
        %s194 = sand.u32 %s76, 1
        %s195 = smul.addr %s194, 8
        %s196 = scalar_lea.vmem [#allocation2], %s195
        %p197 = pneg %p89
        %p198 = pneg %p86
        %p199 = pneg %p119
        %p200 = pneg %p116
        %s201 = sand.u32 %s106, 1
        %s202 = scalar_lea.sflag [#allocation4], %s201
        %s203 = sand.u32 %s106, 1
        %s204 = smul.addr %s203, 8
        %s205 = scalar_lea.vmem [#allocation5], %s204
        %p206 = scmp.lt.s32.totalorder %s25, 0
        %s207 = scalar_select %p206, %s25, 0
        %s208 = smul.addr %s207, 2
        %s209 = scalar_lea.vmem %s0, %s208
        %s210 = smul.u32 4, %s26
        %s211 = smul.u32 4, %s26
        %v212 = vld [vmem:[%s209] sm:$0x3]
        %v213 = vld [vmem:[%s180] sm:$0xff]
        %215 = vset.pattern.permute.xlu0 0
        %216 = vperm.xlu0 %215, %v212
        %v217 = vpop.permute.xlu0 %216
        %v219 = vunpack.c.l.s4 269488144
        %v220 = vunpack.c.0.s8 %v219
        %v221 = vperm.slane %v217, %v220
        %v223 = vmul.f32 %v213, %v221
        %224 = vst [vmem:[%s205] sm:$0xff] %v223
        %s225 = sand.u32 %s106, 1
        %s226 = scalar_lea.sflag [#allocation4], %s225
        %s227 = sand.u32 %s106, 1
        %s228 = smul.addr %s227, 8
        %s229 = scalar_lea.vmem [#allocation5], %s228
        // Predicated region
        $region33: #{tpu_custom_call.1} parent=27 // pred_check
          %p230 = pneg %p116
        $region34: #{tpu_custom_call.1} parent=27 // pred_check_branch
          %232 = sbr.rel (%p230) target = $region36
        $region35: #{tpu_custom_call.1} parent=27 // pred_region
          %s233 = smul.u32 4, %s26
          %235 = vsyncadd %s226, 0
          %s236 = smul.addr %s25, 8
          %s237 = sadd.s32 %s233, %s236
          %s238 = smul.addr %s24, 8
          %s239 = sadd.s32 %s237, %s238
          %s240 = smul.addr %s239, 2
          %s241 = scalar_lea.hbm %s2, %s240
          %s243 = sshll.u32 %s229, 4
          %s244 = int_to_ptr.vmem [resolvable:$true] %s243
          %s245 = sshll.u32 %s241, 4
          %s246 = int_to_ptr.hbm [resolvable:$true] %s245
          %248 = dma.vmem_to_hbm [thread:$0]  %s244, 128, %s246, %s226
        $region36: #{tpu_custom_call.1} parent=27 // pred_fallthru
          _
      $region28: #{tpu_custom_call.1} parent=5 // pred_fallthru
        _
      %p249 = scmp.le.s32.totalorder 2, %s14
      // Predicated region
      $region37: #{tpu_custom_call.1} parent=5 // pred_check
        %p250 = pneg %p249
      $region38: #{tpu_custom_call.1} parent=5 // pred_check_branch
        %252 = sbr.rel (%p250) target = $region40
      $region39: #{tpu_custom_call.1} parent=5 // pred_region
        %s253 = ssub.s32 %s14, 2
        // Predicated region
        $region41: #{tpu_custom_call.1} parent=39 // pred_check
          %p254 = pneg %p122
        $region42: #{tpu_custom_call.1} parent=39 // pred_check_branch
          %256 = sbr.rel (%p254) target = $region44
        $region43: #{tpu_custom_call.1} parent=39 // pred_region
          %s257 = sand.u32 %s107, 1
          %s258 = scalar_lea.sflag [#allocation4], %s257
          %s259 = sand.u32 %s107, 1
          %s260 = smul.addr %s259, 8
          %s261 = scalar_lea.vmem [#allocation5], %s260
          %263 = dma.done %s258, 128
        $region44: #{tpu_custom_call.1} parent=39 // pred_fallthru
          _
      $region40: #{tpu_custom_call.1} parent=5 // pred_fallthru
        _
    $region6: #{tpu_custom_call.1} parent=1 // loop_footer
      %s18 = sadd.s32 1, %s14
    $region7: #{tpu_custom_call.1} parent=1 // loop_footer_branch
      %13 = sbr.rel target = $region3
    $region8: #{tpu_custom_call.1} parent=1 // loop_exit
      _
    %264 = vsyncpa [#allocation3], 1
    %s265 = scalar_lea.sflag [#allocation3], 1
    %266 = vsyncpa %s265, 1
    %267 = vsyncpa [#allocation4], 1
    %s268 = scalar_lea.sflag [#allocation4], 1
    %269 = vsyncpa %s268, 1

</llo_original>
